<compile_context>
chip_gen: v7x
topology: tpu7x:2x2x1
jax: 0.10.0
libtpu: 0.0.40
codegen_flags: <defaults>
</compile_context>

<pallas_src>
import functools

import jax
import jax.numpy as jnp
from jax import lax
from jax.experimental import pallas as pl
from jax.experimental.pallas import tpu as pltpu


def _round_up(x, m):
    return (x + m - 1) // m * m


def _pick_tile(n, d_pad, feat_bytes, vmem_budget=40 << 20):
    """Largest lane-dense tile that keeps >=2 row tiles, bounded padding, and
    a pipelined VMEM footprint under ~40 MiB (safe on v7x's 64 MiB)."""
    n128 = _round_up(n, 128)

    def fits(t):
        # 2 inputs x 2 pipeline buffers x (t, d_pad) feats + ~4 f32 (t, t) temps
        return 4 * t * d_pad * feat_bytes + 4 * t * t * 4 <= vmem_budget

    for t in (512, 256, 128):
        if t > max(n128, 128) or not fits(t):
            continue
        n_pad = _round_up(n, t)
        if n_pad // t >= 2 and n_pad <= 1.5 * n:
            return t
    return 128


def _simclr_kernel(feat_row_ref, feat_col_ref, out_ref, denom_acc, pos_acc, *,
                   n, inv_temperature):
    """One (row-tile i, column-tile k) grid step."""
    i = pl.program_id(0)
    k = pl.program_id(1)
    num_k = pl.num_programs(1)
    tm = feat_row_ref.shape[0]
    tn = feat_col_ref.shape[0]
    b = n // 2

    @pl.when(k == 0)
    def _init():
        denom_acc[...] = jnp.zeros_like(denom_acc)
        pos_acc[...] = jnp.zeros_like(pos_acc)

    # (TM, TN) similarity tile on the MXU; contract dim 1 of both operands so
    # no transposed copy of the column tile is materialized. bf16 x bf16 with
    # f32 accumulation; temperature folded in as a constant VPU multiply.
    sim = lax.dot_general(
        feat_row_ref[...], feat_col_ref[...],
        dimension_numbers=(((1,), (1,)), ((), ())),
        preferred_element_type=jnp.float32,
    ) * inv_temperature

    # --- Denominator -------------------------------------------------------
    # Masks are only needed on tiles touching the diagonal (i == k, square
    # tiles) or the zero-padded columns (last column tile when n_pad > n).
    needs_mask = jnp.logical_or(i == k, (k + 1) * tn > n)

    @pl.when(jnp.logical_not(needs_mask))
    def _denom_fast():
        denom_acc[...] += jnp.sum(jnp.exp(sim), axis=1, keepdims=True)

    @pl.when(needs_mask)
    def _denom_masked():
        gr = i * tm + lax.broadcasted_iota(jnp.int32, (tm, tn), 0)
        gc = k * tn + lax.broadcasted_iota(jnp.int32, (tm, tn), 1)
        keep = jnp.logical_and(gr != gc, gc < n)
        denom_acc[...] += jnp.sum(jnp.where(keep, jnp.exp(sim), 0.0),
                                  axis=1, keepdims=True)

    # --- Positive pair ------------------------------------------------------
    # Column (row + B) mod 2B. Only the column tiles overlapping the row tile
    # shifted by +-B can contain partners; gate the full-tile where+reduce with
    # a scalar pl.when (conservative check, exact mask inside).
    row_lo = i * tm
    col_lo = k * tn
    hit_hi = jnp.logical_and(col_lo < row_lo + tm + b, col_lo + tn > row_lo + b)
    hit_lo = jnp.logical_and(col_lo < row_lo + tm - b, col_lo + tn > row_lo - b)

    @pl.when(jnp.logical_or(hit_hi, hit_lo))
    def _pos():
        gr = i * tm + lax.broadcasted_iota(jnp.int32, (tm, tn), 0)
        gc = k * tn + lax.broadcasted_iota(jnp.int32, (tm, tn), 1)
        partner = jnp.where(gr < b, gr + b, gr - b)
        pos_acc[...] += jnp.sum(jnp.where(gc == partner, sim, 0.0),
                                axis=1, keepdims=True)

    @pl.when(k == num_k - 1)
    def _finalize():
        out_ref[...] = pos_acc[...] - jnp.log(denom_acc[...] + 1e-07)


def simclr_loss(z1, z2, labels=None, temperature=0.07, block_size=None,
                compute_dtype=jnp.bfloat16):
    """Pallas TPU implementation of SimCLRLoss.forward (labels unused, as in ref).

    compute_dtype controls the streamed feature dtype (bf16 default for HBM
    bandwidth and the bf16-native MXU; pass jnp.float32 for exact f32 parity).
    """
    del labels  # unused by the reference loss
    assert z1.shape == z2.shape and z1.ndim == 2
    batch, dim = z1.shape
    n = 2 * batch

    compute_dtype = jnp.dtype(compute_dtype)
    feat_bytes = compute_dtype.itemsize
    d_pad = _round_up(dim, 128)                      # lane-dense feature dim

    if block_size is None:
        block_size = _pick_tile(n, d_pad, feat_bytes)
    sublane = 16 if feat_bytes < 4 else 8
    assert block_size % sublane == 0, (block_size, compute_dtype)
    tile = block_size
    n_pad = _round_up(n, tile)

    # Padded, concatenated feature matrix in a single buffer (compute dtype).
    feats = jnp.zeros((n_pad, d_pad), compute_dtype)
    feats = feats.at[:batch, :dim].set(z1.astype(compute_dtype))
    feats = feats.at[batch:n, :dim].set(z2.astype(compute_dtype))

    # TODO(synk): a traced (jit-abstract) temperature would need an SMEM scalar
    # input instead of a Python constant.
    inv_t = 1.0 / float(temperature)

    kernel = functools.partial(_simclr_kernel, n=n, inv_temperature=inv_t)
    grid = (n_pad // tile, n_pad // tile)

    log_prob_pos = pl.pallas_call(
        kernel,
        out_shape=jax.ShapeDtypeStruct((n_pad, 1), jnp.float32),
        grid_spec=pltpu.PrefetchScalarGridSpec(
            num_scalar_prefetch=0,
            grid=grid,
            in_specs=[
                pl.BlockSpec((tile, d_pad), lambda i, k: (i, 0)),   # row (query) tile
                pl.BlockSpec((tile, d_pad), lambda i, k: (k, 0)),   # column tile
            ],
            out_specs=pl.BlockSpec((tile, 1), lambda i, k: (i, 0)),
            scratch_shapes=[
                pltpu.VMEM((tile, 1), jnp.float32),   # denominator accumulator
                pltpu.VMEM((tile, 1), jnp.float32),   # positive-sim accumulator
            ],
        ),
        compiler_params=pltpu.CompilerParams(
            dimension_semantics=("parallel", "arbitrary"),
            vmem_limit_bytes=48 * 1024 * 1024,
        ),
    )(feats, feats)

    # Final O(n) reduction in plain JAX (padded rows dropped).
    return -jnp.sum(log_prob_pos[:n, 0]) / n


def _reference_loss(z1, z2, temperature=0.07):
    # Pure-JAX reference mirroring the PyTorch code exactly.
    batch_size = z1.shape[0]
    features = jnp.concatenate([z1, z2], axis=0)
    similarity = features @ features.T / temperature
    n = 2 * batch_size
    pos_mask = jnp.zeros((n, n), jnp.float32)
    pos_mask = pos_mask.at[:batch_size, batch_size:].set(jnp.eye(batch_size))
    pos_mask = pos_mask.at[batch_size:, :batch_size].set(jnp.eye(batch_size))
    mask = 1.0 - jnp.eye(n)
    exp_sim = jnp.exp(similarity) * mask
    log_prob = similarity - jnp.log(exp_sim.sum(axis=1, keepdims=True) + 1e-07)
    return -(pos_mask * log_prob).sum() / n


if __name__ == "__main__":
    key = jax.random.PRNGKey(0)
    k1, k2, k3, k4 = jax.random.split(key, 4)

    # Test 1: single-tile path (B=8, D=32), f32 compute mode — exact parity
    # with the reference within tight tolerance.
    B, D = 8, 32
    z1 = jax.random.normal(k1, (B, D), dtype=jnp.float32)
    z2 = jax.random.normal(k2, (B, D), dtype=jnp.float32)
    z1 = z1 / jnp.linalg.norm(z1, axis=1, keepdims=True)
    z2 = z2 / jnp.linalg.norm(z2, axis=1, keepdims=True)
    labels = jnp.zeros((B,), jnp.int32)  # unused by the loss (matches reference)

    loss_f32 = simclr_loss(z1, z2, labels, temperature=0.07,
                           compute_dtype=jnp.float32)
    jax.block_until_ready(loss_f32)
    ref = _reference_loss(z1, z2, temperature=0.07)
    assert jnp.allclose(loss_f32, ref, rtol=1e-4, atol=1e-4), (loss_f32, ref)

    # Test 1b: default bf16 streaming path; compare against the reference run
    # on bf16-rounded inputs (both accumulate in f32) — tight tolerance.
    z1b = z1.astype(jnp.bfloat16).astype(jnp.float32)
    z2b = z2.astype(jnp.bfloat16).astype(jnp.float32)
    loss_bf16 = simclr_loss(z1, z2, labels, temperature=0.07)
    jax.block_until_ready(loss_bf16)
    ref_b = _reference_loss(z1b, z2b, temperature=0.07)
    assert jnp.allclose(loss_bf16, ref_b, rtol=1e-3, atol=1e-3), (loss_bf16, ref_b)

    # Test 2: multi-tile grid with row/column padding (B=11 -> 2B=22 padded to
    # 32, tile=16 -> 2x2 grid) exercising the flash-style accumulation, the
    # masked diagonal / padded-column path and the partner-straddle gating.
    B2, D2 = 11, 48
    a1 = jax.random.normal(k3, (B2, D2), dtype=jnp.float32)
    a2 = jax.random.normal(k4, (B2, D2), dtype=jnp.float32)
    a1 = a1 / jnp.linalg.norm(a1, axis=1, keepdims=True)
    a2 = a2 / jnp.linalg.norm(a2, axis=1, keepdims=True)
    a1b = a1.astype(jnp.bfloat16).astype(jnp.float32)
    a2b = a2.astype(jnp.bfloat16).astype(jnp.float32)

    loss2 = simclr_loss(a1, a2, None, temperature=0.1, block_size=16)
    jax.block_until_ready(loss2)
    ref2 = _reference_loss(a1b, a2b, temperature=0.1)
    assert jnp.allclose(loss2, ref2, rtol=1e-3, atol=1e-3), (loss2, ref2)

    print("KERNEL_OK")
</pallas_src>

<mosaic_0001>
module attributes {stable_mosaic.version = 11 : i64} {
  func.func @_simclr_kernel(%arg0: i32, %arg1: i32, %arg2: memref<128x128xf32, #tpu.memory_space<vmem>>, %arg3: memref<128x128xf32, #tpu.memory_space<vmem>>, %arg4: memref<128x1xf32, #tpu.memory_space<vmem>>, %arg5: memref<128x1xf32, #tpu.memory_space<vmem>>, %arg6: memref<128x1xf32, #tpu.memory_space<vmem>>) attributes {dimension_semantics = [#tpu.dimension_semantics<parallel>, #tpu.dimension_semantics<arbitrary>], iteration_bounds = array<i64: 1, 1>, scalar_prefetch = 0 : i64, scratch_operands = 2 : i64, tpu.core_type = #tpu.core_type<tc>, window_params = [{transform_indices = @transform_0, window_bounds = array<i64: 128, 128>}, {transform_indices = @transform_1, window_bounds = array<i64: 128, 128>}, {transform_indices = @transform_2, window_bounds = array<i64: 128, 1>}]} {
    %c0_i32 = arith.constant 0 : i32
    %0 = arith.cmpi eq, %arg1, %c0_i32 : i32
    %1 = arith.extui %0 : i1 to i32
    %c0_i32_0 = arith.constant 0 : i32
    %2 = arith.cmpi ne, %1, %c0_i32_0 : i32
    scf.if %2 {
      %cst_19 = arith.constant 0.000000e+00 : f32
      %40 = vector.broadcast %cst_19 : f32 to vector<128x1xf32>
      %c0_20 = arith.constant 0 : index
      %c0_21 = arith.constant 0 : index
      %41 = vector.load %arg5[%c0_20, %c0_21] : memref<128x1xf32, #tpu.memory_space<vmem>>, vector<128x1xf32>
      tpu.vector_store %arg5[%c0_20, %c0_21], %40 {strides = array<i32>} : memref<128x1xf32, #tpu.memory_space<vmem>>, vector<128x1xf32>,
      %cst_22 = arith.constant 0.000000e+00 : f32
      %42 = vector.broadcast %cst_22 : f32 to vector<128x1xf32>
      %c0_23 = arith.constant 0 : index
      %c0_24 = arith.constant 0 : index
      %43 = vector.load %arg6[%c0_23, %c0_24] : memref<128x1xf32, #tpu.memory_space<vmem>>, vector<128x1xf32>
      tpu.vector_store %arg6[%c0_23, %c0_24], %42 {strides = array<i32>} : memref<128x1xf32, #tpu.memory_space<vmem>>, vector<128x1xf32>,
    } else {
    }
    %c0 = arith.constant 0 : index
    %c0_1 = arith.constant 0 : index
    %3 = vector.load %arg2[%c0, %c0_1] : memref<128x128xf32, #tpu.memory_space<vmem>>, vector<128x128xf32>
    %c0_2 = arith.constant 0 : index
    %c0_3 = arith.constant 0 : index
    %4 = vector.load %arg3[%c0_2, %c0_3] : memref<128x128xf32, #tpu.memory_space<vmem>>, vector<128x128xf32>
    %cst = arith.constant dense<0.000000e+00> : vector<128x128xf32>
    %5 = tpu.matmul %3, %4, %cst {dimension_numbers = #tpu.dot_dimension_numbers<[1], [1], [0], [0], [0, 0, 1, 0], [], []>} : vector<128x128xf32>, vector<128x128xf32>, vector<128x128xf32> -> vector<128x128xf32>
    %cst_4 = arith.constant 14.2857141 : f32
    %6 = vector.broadcast %cst_4 : f32 to vector<128x128xf32>
    %7 = arith.mulf %5, %6 : vector<128x128xf32>
    %8 = arith.cmpi eq, %arg0, %arg1 : i32
    %c1_i32 = arith.constant 1 : i32
    %9 = arith.addi %arg1, %c1_i32 : i32
    %c128_i32 = arith.constant 128 : i32
    %10 = arith.muli %9, %c128_i32 : i32
    %c16_i32 = arith.constant 16 : i32
    %11 = arith.cmpi sgt, %10, %c16_i32 : i32
    %12 = arith.ori %8, %11 : i1
    %true = arith.constant true
    %13 = arith.xori %12, %true : i1
    %14 = arith.extui %13 : i1 to i32
    %c0_i32_5 = arith.constant 0 : i32
    %15 = arith.cmpi ne, %14, %c0_i32_5 : i32
    scf.if %15 {
      %c0_19 = arith.constant 0 : index
      %c0_20 = arith.constant 0 : index
      %40 = vector.load %arg5[%c0_19, %c0_20] : memref<128x1xf32, #tpu.memory_space<vmem>>, vector<128x1xf32>
      %41 = math.exp %7 : vector<128x128xf32>
      %cst_21 = arith.constant dense<0.000000e+00> : vector<128xf32>
      %42 = vector.multi_reduction <add>, %41, %cst_21 [1] : vector<128x128xf32> to vector<128xf32>
      %43 = vector.shape_cast %42 : vector<128xf32> to vector<128x1xf32>
      %44 = arith.addf %40, %43 : vector<128x1xf32>
      %c0_22 = arith.constant 0 : index
      %c0_23 = arith.constant 0 : index
      %45 = vector.load %arg5[%c0_22, %c0_23] : memref<128x1xf32, #tpu.memory_space<vmem>>, vector<128x1xf32>
      tpu.vector_store %arg5[%c0_22, %c0_23], %44 {strides = array<i32>} : memref<128x1xf32, #tpu.memory_space<vmem>>, vector<128x1xf32>,
    } else {
    }
    %16 = arith.extui %12 : i1 to i32
    %c0_i32_6 = arith.constant 0 : i32
    %17 = arith.cmpi ne, %16, %c0_i32_6 : i32
    scf.if %17 {
      %c128_i32_19 = arith.constant 128 : i32
      %40 = arith.muli %arg0, %c128_i32_19 : i32
      %41 = tpu.iota {dimensions = array<i32: 0>} : vector<128x128xi32>
      %42 = vector.broadcast %40 : i32 to vector<128x128xi32>
      %43 = arith.addi %42, %41 : vector<128x128xi32>
      %c128_i32_20 = arith.constant 128 : i32
      %44 = arith.muli %arg1, %c128_i32_20 : i32
      %45 = tpu.iota {dimensions = array<i32: 1>} : vector<128x128xi32>
      %46 = vector.broadcast %44 : i32 to vector<128x128xi32>
      %47 = arith.addi %46, %45 : vector<128x128xi32>
      %48 = arith.cmpi ne, %43, %47 : vector<128x128xi32>
      %c16_i32_21 = arith.constant 16 : i32
      %49 = vector.broadcast %c16_i32_21 : i32 to vector<128x128xi32>
      %50 = arith.cmpi slt, %47, %49 : vector<128x128xi32>
      %51 = arith.andi %48, %50 : vector<128x128xi1>
      %c0_22 = arith.constant 0 : index
      %c0_23 = arith.constant 0 : index
      %52 = vector.load %arg5[%c0_22, %c0_23] : memref<128x1xf32, #tpu.memory_space<vmem>>, vector<128x1xf32>
      %53 = math.exp %7 : vector<128x128xf32>
      %cst_24 = arith.constant 0.000000e+00 : f32
      %54 = vector.broadcast %cst_24 : f32 to vector<128x128xf32>
      %55 = arith.select %51, %53, %54 : vector<128x128xi1>, vector<128x128xf32>
      %cst_25 = arith.constant dense<0.000000e+00> : vector<128xf32>
      %56 = vector.multi_reduction <add>, %55, %cst_25 [1] : vector<128x128xf32> to vector<128xf32>
      %57 = vector.shape_cast %56 : vector<128xf32> to vector<128x1xf32>
      %58 = arith.addf %52, %57 : vector<128x1xf32>
      %c0_26 = arith.constant 0 : index
      %c0_27 = arith.constant 0 : index
      %59 = vector.load %arg5[%c0_26, %c0_27] : memref<128x1xf32, #tpu.memory_space<vmem>>, vector<128x1xf32>
      tpu.vector_store %arg5[%c0_26, %c0_27], %58 {strides = array<i32>} : memref<128x1xf32, #tpu.memory_space<vmem>>, vector<128x1xf32>,
    } else {
    }
    %c128_i32_7 = arith.constant 128 : i32
    %18 = arith.muli %arg0, %c128_i32_7 : i32
    %c128_i32_8 = arith.constant 128 : i32
    %19 = arith.muli %arg1, %c128_i32_8 : i32
    %c128_i32_9 = arith.constant 128 : i32
    %20 = arith.addi %18, %c128_i32_9 : i32
    %c8_i32 = arith.constant 8 : i32
    %21 = arith.addi %20, %c8_i32 : i32
    %22 = arith.cmpi slt, %19, %21 : i32
    %c128_i32_10 = arith.constant 128 : i32
    %23 = arith.addi %19, %c128_i32_10 : i32
    %c8_i32_11 = arith.constant 8 : i32
    %24 = arith.addi %18, %c8_i32_11 : i32
    %25 = arith.cmpi sgt, %23, %24 : i32
    %26 = arith.andi %22, %25 : i1
    %c128_i32_12 = arith.constant 128 : i32
    %27 = arith.addi %18, %c128_i32_12 : i32
    %c8_i32_13 = arith.constant 8 : i32
    %28 = arith.subi %27, %c8_i32_13 : i32
    %29 = arith.cmpi slt, %19, %28 : i32
    %c128_i32_14 = arith.constant 128 : i32
    %30 = arith.addi %19, %c128_i32_14 : i32
    %c8_i32_15 = arith.constant 8 : i32
    %31 = arith.subi %18, %c8_i32_15 : i32
    %32 = arith.cmpi sgt, %30, %31 : i32
    %33 = arith.andi %29, %32 : i1
    %34 = arith.ori %26, %33 : i1
    %35 = arith.extui %34 : i1 to i32
    %c0_i32_16 = arith.constant 0 : i32
    %36 = arith.cmpi ne, %35, %c0_i32_16 : i32
    scf.if %36 {
      %c128_i32_19 = arith.constant 128 : i32
      %40 = arith.muli %arg0, %c128_i32_19 : i32
      %41 = tpu.iota {dimensions = array<i32: 0>} : vector<128x128xi32>
      %42 = vector.broadcast %40 : i32 to vector<128x128xi32>
      %43 = arith.addi %42, %41 : vector<128x128xi32>
      %c128_i32_20 = arith.constant 128 : i32
      %44 = arith.muli %arg1, %c128_i32_20 : i32
      %45 = tpu.iota {dimensions = array<i32: 1>} : vector<128x128xi32>
      %46 = vector.broadcast %44 : i32 to vector<128x128xi32>
      %47 = arith.addi %46, %45 : vector<128x128xi32>
      %c8_i32_21 = arith.constant 8 : i32
      %48 = vector.broadcast %c8_i32_21 : i32 to vector<128x128xi32>
      %49 = arith.cmpi slt, %43, %48 : vector<128x128xi32>
      %c8_i32_22 = arith.constant 8 : i32
      %50 = vector.broadcast %c8_i32_22 : i32 to vector<128x128xi32>
      %51 = arith.addi %43, %50 : vector<128x128xi32>
      %c8_i32_23 = arith.constant 8 : i32
      %52 = vector.broadcast %c8_i32_23 : i32 to vector<128x128xi32>
      %53 = arith.subi %43, %52 : vector<128x128xi32>
      %54 = arith.select %49, %51, %53 : vector<128x128xi1>, vector<128x128xi32>
      %c0_24 = arith.constant 0 : index
      %c0_25 = arith.constant 0 : index
      %55 = vector.load %arg6[%c0_24, %c0_25] : memref<128x1xf32, #tpu.memory_space<vmem>>, vector<128x1xf32>
      %56 = arith.cmpi eq, %47, %54 : vector<128x128xi32>
      %cst_26 = arith.constant 0.000000e+00 : f32
      %57 = vector.broadcast %cst_26 : f32 to vector<128x128xf32>
      %58 = arith.select %56, %7, %57 : vector<128x128xi1>, vector<128x128xf32>
      %cst_27 = arith.constant dense<0.000000e+00> : vector<128xf32>
      %59 = vector.multi_reduction <add>, %58, %cst_27 [1] : vector<128x128xf32> to vector<128xf32>
      %60 = vector.shape_cast %59 : vector<128xf32> to vector<128x1xf32>
      %61 = arith.addf %55, %60 : vector<128x1xf32>
      %c0_28 = arith.constant 0 : index
      %c0_29 = arith.constant 0 : index
      %62 = vector.load %arg6[%c0_28, %c0_29] : memref<128x1xf32, #tpu.memory_space<vmem>>, vector<128x1xf32>
      tpu.vector_store %arg6[%c0_28, %c0_29], %61 {strides = array<i32>} : memref<128x1xf32, #tpu.memory_space<vmem>>, vector<128x1xf32>,
    } else {
    }
    %c0_i32_17 = arith.constant 0 : i32
    %37 = arith.cmpi eq, %arg1, %c0_i32_17 : i32
    %38 = arith.extui %37 : i1 to i32
    %c0_i32_18 = arith.constant 0 : i32
    %39 = arith.cmpi ne, %38, %c0_i32_18 : i32
    scf.if %39 {
      %c0_19 = arith.constant 0 : index
      %c0_20 = arith.constant 0 : index
      %40 = vector.load %arg6[%c0_19, %c0_20] : memref<128x1xf32, #tpu.memory_space<vmem>>, vector<128x1xf32>
      %c0_21 = arith.constant 0 : index
      %c0_22 = arith.constant 0 : index
      %41 = vector.load %arg5[%c0_21, %c0_22] : memref<128x1xf32, #tpu.memory_space<vmem>>, vector<128x1xf32>
      %cst_23 = arith.constant 1.000000e-07 : f32
      %42 = vector.broadcast %cst_23 : f32 to vector<128x1xf32>
      %43 = arith.addf %41, %42 : vector<128x1xf32>
      %44 = math.log %43 : vector<128x1xf32>
      %45 = arith.subf %40, %44 : vector<128x1xf32>
      %c0_24 = arith.constant 0 : index
      %c0_25 = arith.constant 0 : index
      %46 = vector.load %arg4[%c0_24, %c0_25] : memref<128x1xf32, #tpu.memory_space<vmem>>, vector<128x1xf32>
      tpu.vector_store %arg4[%c0_24, %c0_25], %45 {strides = array<i32>} : memref<128x1xf32, #tpu.memory_space<vmem>>, vector<128x1xf32>,
    } else {
    }
    return
  }
  func.func @transform_0(%arg0: i32, %arg1: i32) -> (i32, i32) {
    %c0_i32 = arith.constant 0 : i32
    %c0_i32_0 = arith.constant 0 : i32
    return %arg0, %c0_i32 : i32, i32
  }
  func.func @transform_1(%arg0: i32, %arg1: i32) -> (i32, i32) {
    %c0_i32 = arith.constant 0 : i32
    %c0_i32_0 = arith.constant 0 : i32
    return %arg1, %c0_i32 : i32, i32
  }
  func.func @transform_2(%arg0: i32, %arg1: i32) -> (i32, i32) {
    %c0_i32 = arith.constant 0 : i32
    %c0_i32_0 = arith.constant 0 : i32
    return %arg0, %c0_i32 : i32, i32
  }
}

</mosaic_0001>

<llo_original>
// kernel: tpu_custom_call.1
$region0: #{tpu_custom_call.1}
  #allocation0 [shape = 'u32[]', space=smem, size = 0x4, offset = 0x4, fixed_abs, tag = 'smem constant byte address 0x4 - core index']
  #allocation1 [shape = 'u32[144,128]{1,0:T(1,128)}', space=vmem, size = 0x12000, scoped, tag = 'internal scratch']
  #allocation2 [shape = 'f32[128,1]{1,0:T(8,128)}', space=vmem, size = 0x10000, scoped, tag = 'scratch operand']
  #allocation3 [shape = 'f32[128,1]{1,0:T(8,128)}', space=vmem, size = 0x10000, scoped, tag = 'scratch operand']
  %s0 = inlined_call_operand.hbm [shape: f32[128,128], index: 0, kind: input, shape index: {}]
  %s1 = inlined_call_operand.hbm [shape: f32[128,128], index: 1, kind: input, shape index: {}]
  %s2 = inlined_call_operand.vmem [shape: f32[128,1], index: 2, kind: output, shape index: {}]
  %s3 = sld [smem:[#allocation0]]
  $region46: #{tpu_custom_call.1} parent=0
    _
  %s5 = ssub.s32 1, %s3
  %s6 = scalar_select 0, %s5, %s3
  $region1: #{tpu_custom_call.1} parent=0
    #allocation4 [shape = 'u8[65536]{0}', space=vmem, size = 0x10000, scoped, tag = 'input window, operand 0, single buffered']
    #allocation5 [shape = 's32[1]{0}', space=sflag, size = 0x4, scoped, tag = 'scoped memory for tpu_custom_call.1']
    #allocation6 [shape = 'u8[65536]{0}', space=vmem, size = 0x10000, scoped, tag = 'input window, operand 1, single buffered']
    #allocation7 [shape = 's32[1]{0}', space=sflag, size = 0x4, scoped, tag = 'scoped memory for tpu_custom_call.1']
    %7 = vsyncpa [#allocation5], 0
    %8 = vsyncpa [#allocation7], 0
    // Predicated region
    $region2: #{tpu_custom_call.1} parent=1 // pred_check
      _
    $region3: #{tpu_custom_call.1} parent=1 // pred_check_branch
      %10 = sbr.rel (0) target = $region5
    $region4: #{tpu_custom_call.1} parent=1 // pred_region
      %s12 = ssub.s32 2048, 2048
      %13 = vsyncadd [#allocation5], %s12
      %s14 = sshll.u32 [#allocation4], 4
      %s15 = int_to_ptr.vmem [resolvable:$true] %s14
      %20 = dma.hbm_to_vmem [thread:$0]  %s0, 2048, %s15, [#allocation5], 128, 128, 8
    $region5: #{tpu_custom_call.1} parent=1 // pred_fallthru
      _
    // Predicated region
    $region6: #{tpu_custom_call.1} parent=1 // pred_check
      _
    $region7: #{tpu_custom_call.1} parent=1 // pred_check_branch
      %22 = sbr.rel (0) target = $region9
    $region8: #{tpu_custom_call.1} parent=1 // pred_region
      %s24 = ssub.s32 2048, 2048
      %25 = vsyncadd [#allocation7], %s24
      %s26 = sshll.u32 [#allocation6], 4
      %s27 = int_to_ptr.vmem [resolvable:$true] %s26
      %32 = dma.hbm_to_vmem [thread:$0]  %s1, 2048, %s27, [#allocation7], 128, 128, 8
    $region9: #{tpu_custom_call.1} parent=1 // pred_fallthru
      _
    // Predicated region
    $region10: #{tpu_custom_call.1} parent=1 // pred_check
      _
    $region11: #{tpu_custom_call.1} parent=1 // pred_check_branch
      %34 = sbr.rel (0) target = $region13
    $region12: #{tpu_custom_call.1} parent=1 // pred_region
      %35 = dma.done [#allocation5], 2048
    $region13: #{tpu_custom_call.1} parent=1 // pred_fallthru
      _
    // Predicated region
    $region14: #{tpu_custom_call.1} parent=1 // pred_check
      _
    $region15: #{tpu_custom_call.1} parent=1 // pred_check_branch
      %37 = sbr.rel (0) target = $region17
    $region16: #{tpu_custom_call.1} parent=1 // pred_region
      %38 = dma.done [#allocation7], 2048
    $region17: #{tpu_custom_call.1} parent=1 // pred_fallthru
      _
    %p39 = scmp.eq.s32.totalorder 0, 0
    // Predicated region
    $region18: #{tpu_custom_call.1} parent=1 // pred_check
      %p40 = pneg %p39
    $region19: #{tpu_custom_call.1} parent=1 // pred_check_branch
      %42 = sbr.rel (%p40) target = $region21
    $region20: #{tpu_custom_call.1} parent=1 // pred_region
      %vm43 = vcmask 7168
      %44 = vst.msk [vmem:[#allocation2] sm:$0xff] %vm43, 0.0
      %45 = vst.msk [vmem:[#allocation2 + $0x8] sm:$0xff] %vm43, 0.0
      %46 = vst.msk [vmem:[#allocation2 + $0x10] sm:$0xff] %vm43, 0.0
      %47 = vst.msk [vmem:[#allocation2 + $0x18] sm:$0xff] %vm43, 0.0
      %48 = vst.msk [vmem:[#allocation2 + $0x20] sm:$0xff] %vm43, 0.0
      %49 = vst.msk [vmem:[#allocation2 + $0x28] sm:$0xff] %vm43, 0.0
      %50 = vst.msk [vmem:[#allocation2 + $0x30] sm:$0xff] %vm43, 0.0
      %51 = vst.msk [vmem:[#allocation2 + $0x38] sm:$0xff] %vm43, 0.0
      %52 = vst.msk [vmem:[#allocation2 + $0x40] sm:$0xff] %vm43, 0.0
      %53 = vst.msk [vmem:[#allocation2 + $0x48] sm:$0xff] %vm43, 0.0
      %54 = vst.msk [vmem:[#allocation2 + $0x50] sm:$0xff] %vm43, 0.0
      %55 = vst.msk [vmem:[#allocation2 + $0x58] sm:$0xff] %vm43, 0.0
      %56 = vst.msk [vmem:[#allocation2 + $0x60] sm:$0xff] %vm43, 0.0
      %57 = vst.msk [vmem:[#allocation2 + $0x68] sm:$0xff] %vm43, 0.0
      %58 = vst.msk [vmem:[#allocation2 + $0x70] sm:$0xff] %vm43, 0.0
      %59 = vst.msk [vmem:[#allocation2 + $0x78] sm:$0xff] %vm43, 0.0
      %60 = vst.msk [vmem:[#allocation3] sm:$0xff] %vm43, 0.0
      %61 = vst.msk [vmem:[#allocation3 + $0x8] sm:$0xff] %vm43, 0.0
      %62 = vst.msk [vmem:[#allocation3 + $0x10] sm:$0xff] %vm43, 0.0
      %63 = vst.msk [vmem:[#allocation3 + $0x18] sm:$0xff] %vm43, 0.0
      %64 = vst.msk [vmem:[#allocation3 + $0x20] sm:$0xff] %vm43, 0.0
      %65 = vst.msk [vmem:[#allocation3 + $0x28] sm:$0xff] %vm43, 0.0
      %66 = vst.msk [vmem:[#allocation3 + $0x30] sm:$0xff] %vm43, 0.0
      %67 = vst.msk [vmem:[#allocation3 + $0x38] sm:$0xff] %vm43, 0.0
      %68 = vst.msk [vmem:[#allocation3 + $0x40] sm:$0xff] %vm43, 0.0
      %69 = vst.msk [vmem:[#allocation3 + $0x48] sm:$0xff] %vm43, 0.0
      %70 = vst.msk [vmem:[#allocation3 + $0x50] sm:$0xff] %vm43, 0.0
      %71 = vst.msk [vmem:[#allocation3 + $0x58] sm:$0xff] %vm43, 0.0
      %72 = vst.msk [vmem:[#allocation3 + $0x60] sm:$0xff] %vm43, 0.0
      %73 = vst.msk [vmem:[#allocation3 + $0x68] sm:$0xff] %vm43, 0.0
      %74 = vst.msk [vmem:[#allocation3 + $0x70] sm:$0xff] %vm43, 0.0
      %75 = vst.msk [vmem:[#allocation3 + $0x78] sm:$0xff] %vm43, 0.0
    $region21: #{tpu_custom_call.1} parent=1 // pred_fallthru
      _
    %v76 = vld [vmem:[#allocation4] sm:$0xff]
    %v77 = vld [vmem:[#allocation4 + $0x8] sm:$0xff]
    %v78 = vld [vmem:[#allocation4 + $0x10] sm:$0xff]
    %v79 = vld [vmem:[#allocation4 + $0x18] sm:$0xff]
    %v80 = vld [vmem:[#allocation4 + $0x20] sm:$0xff]
    %v81 = vld [vmem:[#allocation4 + $0x28] sm:$0xff]
    %v82 = vld [vmem:[#allocation4 + $0x30] sm:$0xff]
    %v83 = vld [vmem:[#allocation4 + $0x38] sm:$0xff]
    %v84 = vld [vmem:[#allocation4 + $0x40] sm:$0xff]
    %v85 = vld [vmem:[#allocation4 + $0x48] sm:$0xff]
    %v86 = vld [vmem:[#allocation4 + $0x50] sm:$0xff]
    %v87 = vld [vmem:[#allocation4 + $0x58] sm:$0xff]
    %v88 = vld [vmem:[#allocation4 + $0x60] sm:$0xff]
    %v89 = vld [vmem:[#allocation4 + $0x68] sm:$0xff]
    %v90 = vld [vmem:[#allocation4 + $0x70] sm:$0xff]
    %v91 = vld [vmem:[#allocation4 + $0x78] sm:$0xff]
    %v92 = vld [vmem:[#allocation6] sm:$0xff]
    %v93 = vld [vmem:[#allocation6 + $0x8] sm:$0xff]
    %v94 = vld [vmem:[#allocation6 + $0x10] sm:$0xff]
    %v95 = vld [vmem:[#allocation6 + $0x18] sm:$0xff]
    %v96 = vld [vmem:[#allocation6 + $0x20] sm:$0xff]
    %v97 = vld [vmem:[#allocation6 + $0x28] sm:$0xff]
    %v98 = vld [vmem:[#allocation6 + $0x30] sm:$0xff]
    %v99 = vld [vmem:[#allocation6 + $0x38] sm:$0xff]
    %v100 = vld [vmem:[#allocation6 + $0x40] sm:$0xff]
    %v101 = vld [vmem:[#allocation6 + $0x48] sm:$0xff]
    %v102 = vld [vmem:[#allocation6 + $0x50] sm:$0xff]
    %v103 = vld [vmem:[#allocation6 + $0x58] sm:$0xff]
    %v104 = vld [vmem:[#allocation6 + $0x60] sm:$0xff]
    %v105 = vld [vmem:[#allocation6 + $0x68] sm:$0xff]
    %v106 = vld [vmem:[#allocation6 + $0x70] sm:$0xff]
    %v107 = vld [vmem:[#allocation6 + $0x78] sm:$0xff]
    %108 = vmatprep.subr.mxu0 0.0
    %109 = vmatpush1.xpose.msra.mxu0 %v92
    %110 = vmatprep.subr.mxu0 0.0
    %111 = vmatpush1.xpose.msra.mxu0 %v93
    %112 = vmatprep.subr.mxu0 0.0
    %113 = vmatpush1.xpose.msra.mxu0 %v94
    %114 = vmatprep.subr.mxu0 0.0
    %115 = vmatpush1.xpose.msra.mxu0 %v95
    %116 = vmatprep.subr.mxu0 0.0
    %117 = vmatpush1.xpose.msra.mxu0 %v96
    %118 = vmatprep.subr.mxu0 0.0
    %119 = vmatpush1.xpose.msra.mxu0 %v97
    %120 = vmatprep.subr.mxu0 0.0
    %121 = vmatpush1.xpose.msra.mxu0 %v98
    %122 = vmatprep.subr.mxu0 0.0
    %123 = vmatpush1.xpose.msra.mxu0 %v99
    %124 = vmatprep.subr.mxu0 0.0
    %125 = vmatpush1.xpose.msra.mxu0 %v100
    %126 = vmatprep.subr.mxu0 0.0
    %127 = vmatpush1.xpose.msra.mxu0 %v101
    %128 = vmatprep.subr.mxu0 0.0
    %129 = vmatpush1.xpose.msra.mxu0 %v102
    %130 = vmatprep.subr.mxu0 0.0
    %131 = vmatpush1.xpose.msra.mxu0 %v103
    %132 = vmatprep.subr.mxu0 0.0
    %133 = vmatpush1.xpose.msra.mxu0 %v104
    %134 = vmatprep.subr.mxu0 0.0
    %135 = vmatpush1.xpose.msra.mxu0 %v105
    %136 = vmatprep.subr.mxu0 0.0
    %137 = vmatpush1.xpose.msra.mxu0 %v106
    %138 = vmatprep.subr.mxu0 0.0
    %139 = vmatpush1.xpose.msra.mxu0 %v107
    %140 = vmatprep.subr.mxu0 0.0
    %141 = vmatpush1.xpose.msra.mxu0 0.0
    %142 = vmatprep.subr.mxu0 0.0
    %143 = vmatpush1.xpose.msra.mxu0 0.0
    %144 = vmatprep.subr.mxu0 0.0
    %145 = vmatpush1.xpose.msra.mxu0 0.0
    %146 = vmatprep.subr.mxu0 0.0
    %147 = vmatpush1.xpose.msra.mxu0 0.0
    %148 = vmatprep.subr.mxu0 0.0
    %149 = vmatpush1.xpose.msra.mxu0 0.0
    %150 = vmatprep.subr.mxu0 0.0
    %151 = vmatpush1.xpose.msra.mxu0 0.0
    %152 = vmatprep.subr.mxu0 0.0
    %153 = vmatpush1.xpose.msra.mxu0 0.0
    %154 = vmatprep.subr.mxu0 0.0
    %155 = vmatpush1.xpose.msra.mxu0 0.0
    %156 = vmatprep.subr.mxu0 0.0
    %157 = vmatpush1.xpose.msra.mxu0 0.0
    %158 = vmatprep.subr.mxu0 0.0
    %159 = vmatpush1.xpose.msra.mxu0 0.0
    %160 = vmatprep.subr.mxu0 0.0
    %161 = vmatpush1.xpose.msra.mxu0 0.0
    %162 = vmatprep.subr.mxu0 0.0
    %163 = vmatpush1.xpose.msra.mxu0 0.0
    %164 = vmatprep.subr.mxu0 0.0
    %165 = vmatpush1.xpose.msra.mxu0 0.0
    %166 = vmatprep.subr.mxu0 0.0
    %167 = vmatpush1.xpose.msra.mxu0 0.0
    %168 = vmatprep.subr.mxu0 0.0
    %169 = vmatpush1.xpose.msra.mxu0 0.0
    %170 = vmatprep.subr.mxu0 0.0
    %171 = vmatpush1.xpose.msra.mxu0 0.0
    %172 = vmatprep.mubr.f32.mxu0 0.0
    %173 = vmatmul.mubr.f32.gmra.mrb[0].mxu0 %v76
    %v174 = vpop.f32.mrb[0].mxu0
    %v175 = vadd.f32 0.0, %v174
    %v176 = vpop.f32.mrb[0].mxu0
    %177 = vmatprep.mubr.f32.mxu0 0.0
    %178 = vmatmul.mubr.f32.gmra.mrb[0].mxu0 %v77
    %v179 = vpop.f32.mrb[0].mxu0
    %v180 = vadd.f32 0.0, %v179
    %v181 = vpop.f32.mrb[0].mxu0
    %182 = vmatprep.mubr.f32.mxu0 0.0
    %183 = vmatmul.mubr.f32.gmra.mrb[0].mxu0 %v78
    %v184 = vpop.f32.mrb[0].mxu0
    %v185 = vadd.f32 0.0, %v184
    %v186 = vpop.f32.mrb[0].mxu0
    %187 = vmatprep.mubr.f32.mxu0 0.0
    %188 = vmatmul.mubr.f32.gmra.mrb[0].mxu0 %v79
    %v189 = vpop.f32.mrb[0].mxu0
    %v190 = vadd.f32 0.0, %v189
    %v191 = vpop.f32.mrb[0].mxu0
    %192 = vmatprep.mubr.f32.mxu0 0.0
    %193 = vmatmul.mubr.f32.gmra.mrb[0].mxu0 %v80
    %v194 = vpop.f32.mrb[0].mxu0
    %v195 = vadd.f32 0.0, %v194
    %v196 = vpop.f32.mrb[0].mxu0
    %197 = vmatprep.mubr.f32.mxu0 0.0
    %198 = vmatmul.mubr.f32.gmra.mrb[0].mxu0 %v81
    %v199 = vpop.f32.mrb[0].mxu0
    %v200 = vadd.f32 0.0, %v199
    %v201 = vpop.f32.mrb[0].mxu0
    %202 = vmatprep.mubr.f32.mxu0 0.0
    %203 = vmatmul.mubr.f32.gmra.mrb[0].mxu0 %v82
    %v204 = vpop.f32.mrb[0].mxu0
    %v205 = vadd.f32 0.0, %v204
    %v206 = vpop.f32.mrb[0].mxu0
    %207 = vmatprep.mubr.f32.mxu0 0.0
    %208 = vmatmul.mubr.f32.gmra.mrb[0].mxu0 %v83
    %v209 = vpop.f32.mrb[0].mxu0
    %v210 = vadd.f32 0.0, %v209
    %v211 = vpop.f32.mrb[0].mxu0
    %212 = vmatprep.mubr.f32.mxu0 0.0
    %213 = vmatmul.mubr.f32.gmra.mrb[0].mxu0 %v84
    %v214 = vpop.f32.mrb[0].mxu0
    %v215 = vadd.f32 0.0, %v214
    %v216 = vpop.f32.mrb[0].mxu0
    %217 = vmatprep.mubr.f32.mxu0 0.0
    %218 = vmatmul.mubr.f32.gmra.mrb[0].mxu0 %v85
    %v219 = vpop.f32.mrb[0].mxu0
    %v220 = vadd.f32 0.0, %v219
    %v221 = vpop.f32.mrb[0].mxu0
    %222 = vmatprep.mubr.f32.mxu0 0.0
    %223 = vmatmul.mubr.f32.gmra.mrb[0].mxu0 %v86
    %v224 = vpop.f32.mrb[0].mxu0
    %v225 = vadd.f32 0.0, %v224
    %v226 = vpop.f32.mrb[0].mxu0
    %227 = vmatprep.mubr.f32.mxu0 0.0
    %228 = vmatmul.mubr.f32.gmra.mrb[0].mxu0 %v87
    %v229 = vpop.f32.mrb[0].mxu0
    %v230 = vadd.f32 0.0, %v229
    %v231 = vpop.f32.mrb[0].mxu0
    %232 = vmatprep.mubr.f32.mxu0 0.0
    %233 = vmatmul.mubr.f32.gmra.mrb[0].mxu0 %v88
    %v234 = vpop.f32.mrb[0].mxu0
    %v235 = vadd.f32 0.0, %v234
    %v236 = vpop.f32.mrb[0].mxu0
    %237 = vmatprep.mubr.f32.mxu0 0.0
    %238 = vmatmul.mubr.f32.gmra.mrb[0].mxu0 %v89
    %v239 = vpop.f32.mrb[0].mxu0
    %v240 = vadd.f32 0.0, %v239
    %v241 = vpop.f32.mrb[0].mxu0
    %242 = vmatprep.mubr.f32.mxu0 0.0
    %243 = vmatmul.mubr.f32.gmra.mrb[0].mxu0 %v90
    %v244 = vpop.f32.mrb[0].mxu0
    %v245 = vadd.f32 0.0, %v244
    %v246 = vpop.f32.mrb[0].mxu0
    %247 = vmatprep.mubr.f32.mxu0 0.0
    %248 = vmatmul.mubr.f32.gmra.mrb[0].mxu0 %v91
    %v249 = vpop.f32.mrb[0].mxu0
    %v250 = vadd.f32 0.0, %v249
    %v251 = vpop.f32.mrb[0].mxu0
    %252 = vdwg.mxu0
    %v253 = vmul.f32 %v175, 14.285714
    %v254 = vmul.f32 %v180, 14.285714
    %v255 = vmul.f32 %v185, 14.285714
    %v256 = vmul.f32 %v190, 14.285714
    %v257 = vmul.f32 %v195, 14.285714
    %v258 = vmul.f32 %v200, 14.285714
    %v259 = vmul.f32 %v205, 14.285714
    %v260 = vmul.f32 %v210, 14.285714
    %v261 = vmul.f32 %v215, 14.285714
    %v262 = vmul.f32 %v220, 14.285714
    %v263 = vmul.f32 %v225, 14.285714
    %v264 = vmul.f32 %v230, 14.285714
    %v265 = vmul.f32 %v235, 14.285714
    %v266 = vmul.f32 %v240, 14.285714
    %v267 = vmul.f32 %v245, 14.285714
    %v268 = vmul.f32 %v250, 14.285714
    %p269 = scmp.eq.s32.totalorder 0, 0
    %s270 = sadd.s32 0, 1
    %s271 = smul.u32 %s270, 128
    %p272 = scmp.gt.s32.totalorder %s271, 16
    %p273 = por %p269, %p272
    // Predicated region
    $region22: #{tpu_custom_call.1} parent=1 // pred_check
      %p274 = pneg %p273
    $region23: #{tpu_custom_call.1} parent=1 // pred_check_branch
      %276 = sbr.rel (%p274) target = $region25
    $region24: #{tpu_custom_call.1} parent=1 // pred_region
      %s277 = smul.u32 0, 128
      %v278 = vlaneseq
      %v279 = vshrl.u32 %v278, 7
      %v280 = vadd.s32 %v279, 8
      %v281 = vadd.s32 %v279, 16
      %v282 = vadd.s32 %v279, 24
      %v283 = vadd.s32 %v279, 32
      %v284 = vadd.s32 %v279, 40
      %v285 = vadd.s32 %v279, 48
      %v286 = vadd.s32 %v279, 56
      %v287 = vadd.s32 %v279, 64
      %v288 = vadd.s32 %v279, 72
      %v289 = vadd.s32 %v279, 80
      %v290 = vadd.s32 %v279, 88
      %v291 = vadd.s32 %v279, 96
      %v292 = vadd.s32 %v279, 104
      %v293 = vadd.s32 %v279, 112
      %v294 = vadd.s32 %v279, 120
      %v295 = vstv %s277
      %v296 = vadd.s32 %v295, %v279
      %v297 = vadd.s32 %v295, %v280
      %v298 = vadd.s32 %v295, %v281
      %v299 = vadd.s32 %v295, %v282
      %v300 = vadd.s32 %v295, %v283
      %v301 = vadd.s32 %v295, %v284
      %v302 = vadd.s32 %v295, %v285
      %v303 = vadd.s32 %v295, %v286
      %v304 = vadd.s32 %v295, %v287
      %v305 = vadd.s32 %v295, %v288
      %v306 = vadd.s32 %v295, %v289
      %v307 = vadd.s32 %v295, %v290
      %v308 = vadd.s32 %v295, %v291
      %v309 = vadd.s32 %v295, %v292
      %v310 = vadd.s32 %v295, %v293
      %v311 = vadd.s32 %v295, %v294
      %s312 = smul.u32 0, 128
      %v313 = vlaneseq
      %v314 = vand.u32 %v313, 127
      %v315 = vstv %s312
      %v316 = vadd.s32 %v315, %v314
      %vm317 = vcmp.ne.s32.totalorder %v296, %v316
      %vm318 = vcmp.ne.s32.totalorder %v297, %v316
      %vm319 = vcmp.ne.s32.totalorder %v298, %v316
      %vm320 = vcmp.ne.s32.totalorder %v299, %v316
      %vm321 = vcmp.ne.s32.totalorder %v300, %v316
      %vm322 = vcmp.ne.s32.totalorder %v301, %v316
      %vm323 = vcmp.ne.s32.totalorder %v302, %v316
      %vm324 = vcmp.ne.s32.totalorder %v303, %v316
      %vm325 = vcmp.ne.s32.totalorder %v304, %v316
      %vm326 = vcmp.ne.s32.totalorder %v305, %v316
      %vm327 = vcmp.ne.s32.totalorder %v306, %v316
      %vm328 = vcmp.ne.s32.totalorder %v307, %v316
      %vm329 = vcmp.ne.s32.totalorder %v308, %v316
      %vm330 = vcmp.ne.s32.totalorder %v309, %v316
      %vm331 = vcmp.ne.s32.totalorder %v310, %v316
      %vm332 = vcmp.ne.s32.totalorder %v311, %v316
      %vm333 = vcmp.lt.s32.totalorder %v316, 16
      %vm334 = vmand %vm317, %vm333
      %vm335 = vmand %vm318, %vm333
      %vm336 = vmand %vm319, %vm333
      %vm337 = vmand %vm320, %vm333
      %vm338 = vmand %vm321, %vm333
      %vm339 = vmand %vm322, %vm333
      %vm340 = vmand %vm323, %vm333
      %vm341 = vmand %vm324, %vm333
      %vm342 = vmand %vm325, %vm333
      %vm343 = vmand %vm326, %vm333
      %vm344 = vmand %vm327, %vm333
      %vm345 = vmand %vm328, %vm333
      %vm346 = vmand %vm329, %vm333
      %vm347 = vmand %vm330, %vm333
      %vm348 = vmand %vm331, %vm333
      %vm349 = vmand %vm332, %vm333
      %v350 = vld [vmem:[#allocation2] sm:$0xff]
      %v351 = vld [vmem:[#allocation2 + $0x8] sm:$0xff]
      %v352 = vld [vmem:[#allocation2 + $0x10] sm:$0xff]
      %v353 = vld [vmem:[#allocation2 + $0x18] sm:$0xff]
      %v354 = vld [vmem:[#allocation2 + $0x20] sm:$0xff]
      %v355 = vld [vmem:[#allocation2 + $0x28] sm:$0xff]
      %v356 = vld [vmem:[#allocation2 + $0x30] sm:$0xff]
      %v357 = vld [vmem:[#allocation2 + $0x38] sm:$0xff]
      %v358 = vld [vmem:[#allocation2 + $0x40] sm:$0xff]
      %v359 = vld [vmem:[#allocation2 + $0x48] sm:$0xff]
      %v360 = vld [vmem:[#allocation2 + $0x50] sm:$0xff]
      %v361 = vld [vmem:[#allocation2 + $0x58] sm:$0xff]
      %v362 = vld [vmem:[#allocation2 + $0x60] sm:$0xff]
      %v363 = vld [vmem:[#allocation2 + $0x68] sm:$0xff]
      %v364 = vld [vmem:[#allocation2 + $0x70] sm:$0xff]
      %v365 = vld [vmem:[#allocation2 + $0x78] sm:$0xff]
      %v366 = vmul.f32 %v253, 1.442695
      %v367 = vpow.pop %v366
      %v368 = vmul.f32 %v254, 1.442695
      %v369 = vpow.pop %v368
      %v370 = vmul.f32 %v255, 1.442695
      %v371 = vpow.pop %v370
      %v372 = vmul.f32 %v256, 1.442695
      %v373 = vpow.pop %v372
      %v374 = vmul.f32 %v257, 1.442695
      %v375 = vpow.pop %v374
      %v376 = vmul.f32 %v258, 1.442695
      %v377 = vpow.pop %v376
      %v378 = vmul.f32 %v259, 1.442695
      %v379 = vpow.pop %v378
      %v380 = vmul.f32 %v260, 1.442695
      %v381 = vpow.pop %v380
      %v382 = vmul.f32 %v261, 1.442695
      %v383 = vpow.pop %v382
      %v384 = vmul.f32 %v262, 1.442695
      %v385 = vpow.pop %v384
      %v386 = vmul.f32 %v263, 1.442695
      %v387 = vpow.pop %v386
      %v388 = vmul.f32 %v264, 1.442695
      %v389 = vpow.pop %v388
      %v390 = vmul.f32 %v265, 1.442695
      %v391 = vpow.pop %v390
      %v392 = vmul.f32 %v266, 1.442695
      %v393 = vpow.pop %v392
      %v394 = vmul.f32 %v267, 1.442695
      %v395 = vpow.pop %v394
      %v396 = vmul.f32 %v268, 1.442695
      %v397 = vpow.pop %v396
      %v398 = vsel %vm334, %v367, 0.0
      %v399 = vsel %vm335, %v369, 0.0
      %v400 = vsel %vm336, %v371, 0.0
      %v401 = vsel %vm337, %v373, 0.0
      %v402 = vsel %vm338, %v375, 0.0
      %v403 = vsel %vm339, %v377, 0.0
      %v404 = vsel %vm340, %v379, 0.0
      %v405 = vsel %vm341, %v381, 0.0
      %v406 = vsel %vm342, %v383, 0.0
      %v407 = vsel %vm343, %v385, 0.0
      %v408 = vsel %vm344, %v387, 0.0
      %v409 = vsel %vm345, %v389, 0.0
      %v410 = vsel %vm346, %v391, 0.0
      %v411 = vsel %vm347, %v393, 0.0
      %v412 = vsel %vm348, %v395, 0.0
      %v413 = vsel %vm349, %v397, 0.0
      %414 = vadd.xlane.f32.xlu0 %v398
      %v415 = vpop.xlane.xlu0 %414
      %416 = vadd.xlane.f32.xlu0 %v399
      %v417 = vpop.xlane.xlu0 %416
      %418 = vadd.xlane.f32.xlu0 %v400
      %v419 = vpop.xlane.xlu0 %418
      %420 = vadd.xlane.f32.xlu0 %v401
      %v421 = vpop.xlane.xlu0 %420
      %422 = vadd.xlane.f32.xlu0 %v402
      %v423 = vpop.xlane.xlu0 %422
      %424 = vadd.xlane.f32.xlu0 %v403
      %v425 = vpop.xlane.xlu0 %424
      %426 = vadd.xlane.f32.xlu0 %v404
      %v427 = vpop.xlane.xlu0 %426
      %428 = vadd.xlane.f32.xlu0 %v405
      %v429 = vpop.xlane.xlu0 %428
      %430 = vadd.xlane.f32.xlu0 %v406
      %v431 = vpop.xlane.xlu0 %430
      %432 = vadd.xlane.f32.xlu0 %v407
      %v433 = vpop.xlane.xlu0 %432
      %434 = vadd.xlane.f32.xlu0 %v408
      %v435 = vpop.xlane.xlu0 %434
      %436 = vadd.xlane.f32.xlu0 %v409
      %v437 = vpop.xlane.xlu0 %436
      %438 = vadd.xlane.f32.xlu0 %v410
      %v439 = vpop.xlane.xlu0 %438
      %440 = vadd.xlane.f32.xlu0 %v411
      %v441 = vpop.xlane.xlu0 %440
      %442 = vadd.xlane.f32.xlu0 %v412
      %v443 = vpop.xlane.xlu0 %442
      %444 = vadd.xlane.f32.xlu0 %v413
      %v445 = vpop.xlane.xlu0 %444
      %v446 = vadd.f32 %v350, %v415
      %v447 = vadd.f32 %v351, %v417
      %v448 = vadd.f32 %v352, %v419
      %v449 = vadd.f32 %v353, %v421
      %v450 = vadd.f32 %v354, %v423
      %v451 = vadd.f32 %v355, %v425
      %v452 = vadd.f32 %v356, %v427
      %v453 = vadd.f32 %v357, %v429
      %v454 = vadd.f32 %v358, %v431
      %v455 = vadd.f32 %v359, %v433
      %v456 = vadd.f32 %v360, %v435
      %v457 = vadd.f32 %v361, %v437
      %v458 = vadd.f32 %v362, %v439
      %v459 = vadd.f32 %v363, %v441
      %v460 = vadd.f32 %v364, %v443
      %v461 = vadd.f32 %v365, %v445
      %vm462 = vcmask 7168
      %463 = vst.msk [vmem:[#allocation2] sm:$0xff] %vm462, %v446
      %464 = vst.msk [vmem:[#allocation2 + $0x8] sm:$0xff] %vm462, %v447
      %465 = vst.msk [vmem:[#allocation2 + $0x10] sm:$0xff] %vm462, %v448
      %466 = vst.msk [vmem:[#allocation2 + $0x18] sm:$0xff] %vm462, %v449
      %467 = vst.msk [vmem:[#allocation2 + $0x20] sm:$0xff] %vm462, %v450
      %468 = vst.msk [vmem:[#allocation2 + $0x28] sm:$0xff] %vm462, %v451
      %469 = vst.msk [vmem:[#allocation2 + $0x30] sm:$0xff] %vm462, %v452
      %470 = vst.msk [vmem:[#allocation2 + $0x38] sm:$0xff] %vm462, %v453
      %471 = vst.msk [vmem:[#allocation2 + $0x40] sm:$0xff] %vm462, %v454
      %472 = vst.msk [vmem:[#allocation2 + $0x48] sm:$0xff] %vm462, %v455
      %473 = vst.msk [vmem:[#allocation2 + $0x50] sm:$0xff] %vm462, %v456
      %474 = vst.msk [vmem:[#allocation2 + $0x58] sm:$0xff] %vm462, %v457
      %475 = vst.msk [vmem:[#allocation2 + $0x60] sm:$0xff] %vm462, %v458
      %476 = vst.msk [vmem:[#allocation2 + $0x68] sm:$0xff] %vm462, %v459
      %477 = vst.msk [vmem:[#allocation2 + $0x70] sm:$0xff] %vm462, %v460
      %478 = vst.msk [vmem:[#allocation2 + $0x78] sm:$0xff] %vm462, %v461
    $region25: #{tpu_custom_call.1} parent=1 // pred_fallthru
      _
    %p479 = pneg %p273
    // Predicated region
    $region26: #{tpu_custom_call.1} parent=1 // pred_check
      _
    $region27: #{tpu_custom_call.1} parent=1 // pred_check_branch
      %481 = sbr.rel (%p273) target = $region29
    $region28: #{tpu_custom_call.1} parent=1 // pred_region
      %v482 = vld [vmem:[#allocation2] sm:$0xff]
      %v483 = vld [vmem:[#allocation2 + $0x8] sm:$0xff]
      %v484 = vld [vmem:[#allocation2 + $0x10] sm:$0xff]
      %v485 = vld [vmem:[#allocation2 + $0x18] sm:$0xff]
      %v486 = vld [vmem:[#allocation2 + $0x20] sm:$0xff]
      %v487 = vld [vmem:[#allocation2 + $0x28] sm:$0xff]
      %v488 = vld [vmem:[#allocation2 + $0x30] sm:$0xff]
      %v489 = vld [vmem:[#allocation2 + $0x38] sm:$0xff]
      %v490 = vld [vmem:[#allocation2 + $0x40] sm:$0xff]
      %v491 = vld [vmem:[#allocation2 + $0x48] sm:$0xff]
      %v492 = vld [vmem:[#allocation2 + $0x50] sm:$0xff]
      %v493 = vld [vmem:[#allocation2 + $0x58] sm:$0xff]
      %v494 = vld [vmem:[#allocation2 + $0x60] sm:$0xff]
      %v495 = vld [vmem:[#allocation2 + $0x68] sm:$0xff]
      %v496 = vld [vmem:[#allocation2 + $0x70] sm:$0xff]
      %v497 = vld [vmem:[#allocation2 + $0x78] sm:$0xff]
      %v498 = vmul.f32 %v253, 1.442695
      %v499 = vpow.pop %v498
      %v500 = vmul.f32 %v254, 1.442695
      %v501 = vpow.pop %v500
      %v502 = vmul.f32 %v255, 1.442695
      %v503 = vpow.pop %v502
      %v504 = vmul.f32 %v256, 1.442695
      %v505 = vpow.pop %v504
      %v506 = vmul.f32 %v257, 1.442695
      %v507 = vpow.pop %v506
      %v508 = vmul.f32 %v258, 1.442695
      %v509 = vpow.pop %v508
      %v510 = vmul.f32 %v259, 1.442695
      %v511 = vpow.pop %v510
      %v512 = vmul.f32 %v260, 1.442695
      %v513 = vpow.pop %v512
      %v514 = vmul.f32 %v261, 1.442695
      %v515 = vpow.pop %v514
      %v516 = vmul.f32 %v262, 1.442695
      %v517 = vpow.pop %v516
      %v518 = vmul.f32 %v263, 1.442695
      %v519 = vpow.pop %v518
      %v520 = vmul.f32 %v264, 1.442695
      %v521 = vpow.pop %v520
      %v522 = vmul.f32 %v265, 1.442695
      %v523 = vpow.pop %v522
      %v524 = vmul.f32 %v266, 1.442695
      %v525 = vpow.pop %v524
      %v526 = vmul.f32 %v267, 1.442695
      %v527 = vpow.pop %v526
      %v528 = vmul.f32 %v268, 1.442695
      %v529 = vpow.pop %v528
      %530 = vadd.xlane.f32.xlu0 %v499
      %v531 = vpop.xlane.xlu0 %530
      %532 = vadd.xlane.f32.xlu0 %v501
      %v533 = vpop.xlane.xlu0 %532
      %534 = vadd.xlane.f32.xlu0 %v503
      %v535 = vpop.xlane.xlu0 %534
      %536 = vadd.xlane.f32.xlu0 %v505
      %v537 = vpop.xlane.xlu0 %536
      %538 = vadd.xlane.f32.xlu0 %v507
      %v539 = vpop.xlane.xlu0 %538
      %540 = vadd.xlane.f32.xlu0 %v509
      %v541 = vpop.xlane.xlu0 %540
      %542 = vadd.xlane.f32.xlu0 %v511
      %v543 = vpop.xlane.xlu0 %542
      %544 = vadd.xlane.f32.xlu0 %v513
      %v545 = vpop.xlane.xlu0 %544
      %546 = vadd.xlane.f32.xlu0 %v515
      %v547 = vpop.xlane.xlu0 %546
      %548 = vadd.xlane.f32.xlu0 %v517
      %v549 = vpop.xlane.xlu0 %548
      %550 = vadd.xlane.f32.xlu0 %v519
      %v551 = vpop.xlane.xlu0 %550
      %552 = vadd.xlane.f32.xlu0 %v521
      %v553 = vpop.xlane.xlu0 %552
      %554 = vadd.xlane.f32.xlu0 %v523
      %v555 = vpop.xlane.xlu0 %554
      %556 = vadd.xlane.f32.xlu0 %v525
      %v557 = vpop.xlane.xlu0 %556
      %558 = vadd.xlane.f32.xlu0 %v527
      %v559 = vpop.xlane.xlu0 %558
      %560 = vadd.xlane.f32.xlu0 %v529
      %v561 = vpop.xlane.xlu0 %560
      %v562 = vadd.f32 %v482, %v531
      %v563 = vadd.f32 %v483, %v533
      %v564 = vadd.f32 %v484, %v535
      %v565 = vadd.f32 %v485, %v537
      %v566 = vadd.f32 %v486, %v539
      %v567 = vadd.f32 %v487, %v541
      %v568 = vadd.f32 %v488, %v543
      %v569 = vadd.f32 %v489, %v545
      %v570 = vadd.f32 %v490, %v547
      %v571 = vadd.f32 %v491, %v549
      %v572 = vadd.f32 %v492, %v551
      %v573 = vadd.f32 %v493, %v553
      %v574 = vadd.f32 %v494, %v555
      %v575 = vadd.f32 %v495, %v557
      %v576 = vadd.f32 %v496, %v559
      %v577 = vadd.f32 %v497, %v561
      %vm578 = vcmask 7168
      %579 = vst.msk [vmem:[#allocation2] sm:$0xff] %vm578, %v562
      %580 = vst.msk [vmem:[#allocation2 + $0x8] sm:$0xff] %vm578, %v563
      %581 = vst.msk [vmem:[#allocation2 + $0x10] sm:$0xff] %vm578, %v564
      %582 = vst.msk [vmem:[#allocation2 + $0x18] sm:$0xff] %vm578, %v565
      %583 = vst.msk [vmem:[#allocation2 + $0x20] sm:$0xff] %vm578, %v566
      %584 = vst.msk [vmem:[#allocation2 + $0x28] sm:$0xff] %vm578, %v567
      %585 = vst.msk [vmem:[#allocation2 + $0x30] sm:$0xff] %vm578, %v568
      %586 = vst.msk [vmem:[#allocation2 + $0x38] sm:$0xff] %vm578, %v569
      %587 = vst.msk [vmem:[#allocation2 + $0x40] sm:$0xff] %vm578, %v570
      %588 = vst.msk [vmem:[#allocation2 + $0x48] sm:$0xff] %vm578, %v571
      %589 = vst.msk [vmem:[#allocation2 + $0x50] sm:$0xff] %vm578, %v572
      %590 = vst.msk [vmem:[#allocation2 + $0x58] sm:$0xff] %vm578, %v573
      %591 = vst.msk [vmem:[#allocation2 + $0x60] sm:$0xff] %vm578, %v574
      %592 = vst.msk [vmem:[#allocation2 + $0x68] sm:$0xff] %vm578, %v575
      %593 = vst.msk [vmem:[#allocation2 + $0x70] sm:$0xff] %vm578, %v576
      %594 = vst.msk [vmem:[#allocation2 + $0x78] sm:$0xff] %vm578, %v577
    $region29: #{tpu_custom_call.1} parent=1 // pred_fallthru
      _
    %s595 = smul.u32 0, 128
    %s596 = smul.u32 0, 128
    %s597 = sadd.s32 %s595, 136
    %p598 = scmp.lt.s32.totalorder %s596, %s597
    %s599 = sadd.s32 %s596, 128
    %s600 = sadd.s32 %s595, 8
    %p601 = scmp.gt.s32.totalorder %s599, %s600
    %p602 = pnand %p598, %p601
    %p603 = pneg %p602
    %s604 = sadd.s32 %s595, 120
    %p605 = scmp.lt.s32.totalorder %s596, %s604
    %s606 = ssub.s32 %s595, 8
    %p607 = scmp.gt.s32.totalorder %s599, %s606
    %p608 = pnand %p605, %p607
    %p609 = pneg %p608
    %p610 = por %p603, %p609
    // Predicated region
    $region30: #{tpu_custom_call.1} parent=1 // pred_check
      %p611 = pneg %p610
    $region31: #{tpu_custom_call.1} parent=1 // pred_check_branch
      %613 = sbr.rel (%p611) target = $region33
    $region32: #{tpu_custom_call.1} parent=1 // pred_region
      %v614 = vlaneseq
      %v615 = vshrl.u32 %v614, 7
      %v616 = vadd.s32 %v615, 8
      %v617 = vadd.s32 %v615, 16
      %v618 = vadd.s32 %v615, 24
      %v619 = vadd.s32 %v615, 32
      %v620 = vadd.s32 %v615, 40
      %v621 = vadd.s32 %v615, 48
      %v622 = vadd.s32 %v615, 56
      %v623 = vadd.s32 %v615, 64
      %v624 = vadd.s32 %v615, 72
      %v625 = vadd.s32 %v615, 80
      %v626 = vadd.s32 %v615, 88
      %v627 = vadd.s32 %v615, 96
      %v628 = vadd.s32 %v615, 104
      %v629 = vadd.s32 %v615, 112
      %v630 = vadd.s32 %v615, 120
      %v631 = vstv %s595
      %v632 = vadd.s32 %v631, %v615
      %v633 = vadd.s32 %v631, %v616
      %v634 = vadd.s32 %v631, %v617
      %v635 = vadd.s32 %v631, %v618
      %v636 = vadd.s32 %v631, %v619
      %v637 = vadd.s32 %v631, %v620
      %v638 = vadd.s32 %v631, %v621
      %v639 = vadd.s32 %v631, %v622
      %v640 = vadd.s32 %v631, %v623
      %v641 = vadd.s32 %v631, %v624
      %v642 = vadd.s32 %v631, %v625
      %v643 = vadd.s32 %v631, %v626
      %v644 = vadd.s32 %v631, %v627
      %v645 = vadd.s32 %v631, %v628
      %v646 = vadd.s32 %v631, %v629
      %v647 = vadd.s32 %v631, %v630
      %v648 = vlaneseq
      %v649 = vand.u32 %v648, 127
      %v650 = vstv %s596
      %v651 = vadd.s32 %v650, %v649
      %vm652 = vcmp.lt.s32.totalorder %v632, 8
      %vm653 = vcmp.lt.s32.totalorder %v633, 8
      %vm654 = vcmp.lt.s32.totalorder %v634, 8
      %vm655 = vcmp.lt.s32.totalorder %v635, 8
      %vm656 = vcmp.lt.s32.totalorder %v636, 8
      %vm657 = vcmp.lt.s32.totalorder %v637, 8
      %vm658 = vcmp.lt.s32.totalorder %v638, 8
      %vm659 = vcmp.lt.s32.totalorder %v639, 8
      %vm660 = vcmp.lt.s32.totalorder %v640, 8
      %vm661 = vcmp.lt.s32.totalorder %v641, 8
      %vm662 = vcmp.lt.s32.totalorder %v642, 8
      %vm663 = vcmp.lt.s32.totalorder %v643, 8
      %vm664 = vcmp.lt.s32.totalorder %v644, 8
      %vm665 = vcmp.lt.s32.totalorder %v645, 8
      %vm666 = vcmp.lt.s32.totalorder %v646, 8
      %vm667 = vcmp.lt.s32.totalorder %v647, 8
      %v668 = vadd.s32 %v632, 8
      %v669 = vadd.s32 %v633, 8
      %v670 = vadd.s32 %v634, 8
      %v671 = vadd.s32 %v635, 8
      %v672 = vadd.s32 %v636, 8
      %v673 = vadd.s32 %v637, 8
      %v674 = vadd.s32 %v638, 8
      %v675 = vadd.s32 %v639, 8
      %v676 = vadd.s32 %v640, 8
      %v677 = vadd.s32 %v641, 8
      %v678 = vadd.s32 %v642, 8
      %v679 = vadd.s32 %v643, 8
      %v680 = vadd.s32 %v644, 8
      %v681 = vadd.s32 %v645, 8
      %v682 = vadd.s32 %v646, 8
      %v683 = vadd.s32 %v647, 8
      %v684 = vsub.s32 %v632, 8
      %v685 = vsub.s32 %v633, 8
      %v686 = vsub.s32 %v634, 8
      %v687 = vsub.s32 %v635, 8
      %v688 = vsub.s32 %v636, 8
      %v689 = vsub.s32 %v637, 8
      %v690 = vsub.s32 %v638, 8
      %v691 = vsub.s32 %v639, 8
      %v692 = vsub.s32 %v640, 8
      %v693 = vsub.s32 %v641, 8
      %v694 = vsub.s32 %v642, 8
      %v695 = vsub.s32 %v643, 8
      %v696 = vsub.s32 %v644, 8
      %v697 = vsub.s32 %v645, 8
      %v698 = vsub.s32 %v646, 8
      %v699 = vsub.s32 %v647, 8
      %v700 = vsel %vm652, %v668, %v684
      %v701 = vsel %vm653, %v669, %v685
      %v702 = vsel %vm654, %v670, %v686
      %v703 = vsel %vm655, %v671, %v687
      %v704 = vsel %vm656, %v672, %v688
      %v705 = vsel %vm657, %v673, %v689
      %v706 = vsel %vm658, %v674, %v690
      %v707 = vsel %vm659, %v675, %v691
      %v708 = vsel %vm660, %v676, %v692
      %v709 = vsel %vm661, %v677, %v693
      %v710 = vsel %vm662, %v678, %v694
      %v711 = vsel %vm663, %v679, %v695
      %v712 = vsel %vm664, %v680, %v696
      %v713 = vsel %vm665, %v681, %v697
      %v714 = vsel %vm666, %v682, %v698
      %v715 = vsel %vm667, %v683, %v699
      %v716 = vld [vmem:[#allocation3] sm:$0xff]
      %v717 = vld [vmem:[#allocation3 + $0x8] sm:$0xff]
      %v718 = vld [vmem:[#allocation3 + $0x10] sm:$0xff]
      %v719 = vld [vmem:[#allocation3 + $0x18] sm:$0xff]
      %v720 = vld [vmem:[#allocation3 + $0x20] sm:$0xff]
      %v721 = vld [vmem:[#allocation3 + $0x28] sm:$0xff]
      %v722 = vld [vmem:[#allocation3 + $0x30] sm:$0xff]
      %v723 = vld [vmem:[#allocation3 + $0x38] sm:$0xff]
      %v724 = vld [vmem:[#allocation3 + $0x40] sm:$0xff]
      %v725 = vld [vmem:[#allocation3 + $0x48] sm:$0xff]
      %v726 = vld [vmem:[#allocation3 + $0x50] sm:$0xff]
      %v727 = vld [vmem:[#allocation3 + $0x58] sm:$0xff]
      %v728 = vld [vmem:[#allocation3 + $0x60] sm:$0xff]
      %v729 = vld [vmem:[#allocation3 + $0x68] sm:$0xff]
      %v730 = vld [vmem:[#allocation3 + $0x70] sm:$0xff]
      %v731 = vld [vmem:[#allocation3 + $0x78] sm:$0xff]
      %vm732 = vcmp.eq.s32.totalorder %v651, %v700
      %vm733 = vcmp.eq.s32.totalorder %v651, %v701
      %vm734 = vcmp.eq.s32.totalorder %v651, %v702
      %vm735 = vcmp.eq.s32.totalorder %v651, %v703
      %vm736 = vcmp.eq.s32.totalorder %v651, %v704
      %vm737 = vcmp.eq.s32.totalorder %v651, %v705
      %vm738 = vcmp.eq.s32.totalorder %v651, %v706
      %vm739 = vcmp.eq.s32.totalorder %v651, %v707
      %vm740 = vcmp.eq.s32.totalorder %v651, %v708
      %vm741 = vcmp.eq.s32.totalorder %v651, %v709
      %vm742 = vcmp.eq.s32.totalorder %v651, %v710
      %vm743 = vcmp.eq.s32.totalorder %v651, %v711
      %vm744 = vcmp.eq.s32.totalorder %v651, %v712
      %vm745 = vcmp.eq.s32.totalorder %v651, %v713
      %vm746 = vcmp.eq.s32.totalorder %v651, %v714
      %vm747 = vcmp.eq.s32.totalorder %v651, %v715
      %v748 = vsel %vm732, %v253, 0.0
      %v749 = vsel %vm733, %v254, 0.0
      %v750 = vsel %vm734, %v255, 0.0
      %v751 = vsel %vm735, %v256, 0.0
      %v752 = vsel %vm736, %v257, 0.0
      %v753 = vsel %vm737, %v258, 0.0
      %v754 = vsel %vm738, %v259, 0.0
      %v755 = vsel %vm739, %v260, 0.0
      %v756 = vsel %vm740, %v261, 0.0
      %v757 = vsel %vm741, %v262, 0.0
      %v758 = vsel %vm742, %v263, 0.0
      %v759 = vsel %vm743, %v264, 0.0
      %v760 = vsel %vm744, %v265, 0.0
      %v761 = vsel %vm745, %v266, 0.0
      %v762 = vsel %vm746, %v267, 0.0
      %v763 = vsel %vm747, %v268, 0.0
      %764 = vadd.xlane.f32.xlu0 %v748
      %v765 = vpop.xlane.xlu0 %764
      %766 = vadd.xlane.f32.xlu0 %v749
      %v767 = vpop.xlane.xlu0 %766
      %768 = vadd.xlane.f32.xlu0 %v750
      %v769 = vpop.xlane.xlu0 %768
      %770 = vadd.xlane.f32.xlu0 %v751
      %v771 = vpop.xlane.xlu0 %770
      %772 = vadd.xlane.f32.xlu0 %v752
      %v773 = vpop.xlane.xlu0 %772
      %774 = vadd.xlane.f32.xlu0 %v753
      %v775 = vpop.xlane.xlu0 %774
      %776 = vadd.xlane.f32.xlu0 %v754
      %v777 = vpop.xlane.xlu0 %776
      %778 = vadd.xlane.f32.xlu0 %v755
      %v779 = vpop.xlane.xlu0 %778
      %780 = vadd.xlane.f32.xlu0 %v756
      %v781 = vpop.xlane.xlu0 %780
      %782 = vadd.xlane.f32.xlu0 %v757
      %v783 = vpop.xlane.xlu0 %782
      %784 = vadd.xlane.f32.xlu0 %v758
      %v785 = vpop.xlane.xlu0 %784
      %786 = vadd.xlane.f32.xlu0 %v759
      %v787 = vpop.xlane.xlu0 %786
      %788 = vadd.xlane.f32.xlu0 %v760
      %v789 = vpop.xlane.xlu0 %788
      %790 = vadd.xlane.f32.xlu0 %v761
      %v791 = vpop.xlane.xlu0 %790
      %792 = vadd.xlane.f32.xlu0 %v762
      %v793 = vpop.xlane.xlu0 %792
      %794 = vadd.xlane.f32.xlu0 %v763
      %v795 = vpop.xlane.xlu0 %794
      %v796 = vadd.f32 %v716, %v765
      %v797 = vadd.f32 %v717, %v767
      %v798 = vadd.f32 %v718, %v769
      %v799 = vadd.f32 %v719, %v771
      %v800 = vadd.f32 %v720, %v773
      %v801 = vadd.f32 %v721, %v775
      %v802 = vadd.f32 %v722, %v777
      %v803 = vadd.f32 %v723, %v779
      %v804 = vadd.f32 %v724, %v781
      %v805 = vadd.f32 %v725, %v783
      %v806 = vadd.f32 %v726, %v785
      %v807 = vadd.f32 %v727, %v787
      %v808 = vadd.f32 %v728, %v789
      %v809 = vadd.f32 %v729, %v791
      %v810 = vadd.f32 %v730, %v793
      %v811 = vadd.f32 %v731, %v795
      %vm812 = vcmask 7168
      %813 = vst.msk [vmem:[#allocation3] sm:$0xff] %vm812, %v796
      %814 = vst.msk [vmem:[#allocation3 + $0x8] sm:$0xff] %vm812, %v797
      %815 = vst.msk [vmem:[#allocation3 + $0x10] sm:$0xff] %vm812, %v798
      %816 = vst.msk [vmem:[#allocation3 + $0x18] sm:$0xff] %vm812, %v799
      %817 = vst.msk [vmem:[#allocation3 + $0x20] sm:$0xff] %vm812, %v800
      %818 = vst.msk [vmem:[#allocation3 + $0x28] sm:$0xff] %vm812, %v801
      %819 = vst.msk [vmem:[#allocation3 + $0x30] sm:$0xff] %vm812, %v802
      %820 = vst.msk [vmem:[#allocation3 + $0x38] sm:$0xff] %vm812, %v803
      %821 = vst.msk [vmem:[#allocation3 + $0x40] sm:$0xff] %vm812, %v804
      %822 = vst.msk [vmem:[#allocation3 + $0x48] sm:$0xff] %vm812, %v805
      %823 = vst.msk [vmem:[#allocation3 + $0x50] sm:$0xff] %vm812, %v806
      %824 = vst.msk [vmem:[#allocation3 + $0x58] sm:$0xff] %vm812, %v807
      %825 = vst.msk [vmem:[#allocation3 + $0x60] sm:$0xff] %vm812, %v808
      %826 = vst.msk [vmem:[#allocation3 + $0x68] sm:$0xff] %vm812, %v809
      %827 = vst.msk [vmem:[#allocation3 + $0x70] sm:$0xff] %vm812, %v810
      %828 = vst.msk [vmem:[#allocation3 + $0x78] sm:$0xff] %vm812, %v811
    $region33: #{tpu_custom_call.1} parent=1 // pred_fallthru
      _
    // Predicated region
    $region34: #{tpu_custom_call.1} parent=1 // pred_check
      %p829 = pneg %p39
    $region35: #{tpu_custom_call.1} parent=1 // pred_check_branch
      %831 = sbr.rel (%p829) target = $region37
    $region36: #{tpu_custom_call.1} parent=1 // pred_region
      %v832 = vld [vmem:[#allocation3] sm:$0xff]
      %v833 = vld [vmem:[#allocation3 + $0x8] sm:$0xff]
      %v834 = vld [vmem:[#allocation3 + $0x10] sm:$0xff]
      %v835 = vld [vmem:[#allocation3 + $0x18] sm:$0xff]
      %v836 = vld [vmem:[#allocation3 + $0x20] sm:$0xff]
      %v837 = vld [vmem:[#allocation3 + $0x28] sm:$0xff]
      %v838 = vld [vmem:[#allocation3 + $0x30] sm:$0xff]
      %v839 = vld [vmem:[#allocation3 + $0x38] sm:$0xff]
      %v840 = vld [vmem:[#allocation3 + $0x40] sm:$0xff]
      %v841 = vld [vmem:[#allocation3 + $0x48] sm:$0xff]
      %v842 = vld [vmem:[#allocation3 + $0x50] sm:$0xff]
      %v843 = vld [vmem:[#allocation3 + $0x58] sm:$0xff]
      %v844 = vld [vmem:[#allocation3 + $0x60] sm:$0xff]
      %v845 = vld [vmem:[#allocation3 + $0x68] sm:$0xff]
      %v846 = vld [vmem:[#allocation3 + $0x70] sm:$0xff]
      %v847 = vld [vmem:[#allocation3 + $0x78] sm:$0xff]
      %v848 = vld [vmem:[#allocation2] sm:$0xff]
      %v849 = vld [vmem:[#allocation2 + $0x8] sm:$0xff]
      %v850 = vld [vmem:[#allocation2 + $0x10] sm:$0xff]
      %v851 = vld [vmem:[#allocation2 + $0x18] sm:$0xff]
      %v852 = vld [vmem:[#allocation2 + $0x20] sm:$0xff]
      %v853 = vld [vmem:[#allocation2 + $0x28] sm:$0xff]
      %v854 = vld [vmem:[#allocation2 + $0x30] sm:$0xff]
      %v855 = vld [vmem:[#allocation2 + $0x38] sm:$0xff]
      %v856 = vld [vmem:[#allocation2 + $0x40] sm:$0xff]
      %v857 = vld [vmem:[#allocation2 + $0x48] sm:$0xff]
      %v858 = vld [vmem:[#allocation2 + $0x50] sm:$0xff]
      %v859 = vld [vmem:[#allocation2 + $0x58] sm:$0xff]
      %v860 = vld [vmem:[#allocation2 + $0x60] sm:$0xff]
      %v861 = vld [vmem:[#allocation2 + $0x68] sm:$0xff]
      %v862 = vld [vmem:[#allocation2 + $0x70] sm:$0xff]
      %v863 = vld [vmem:[#allocation2 + $0x78] sm:$0xff]
      %v864 = vadd.f32 %v848, 1e-07
      %v865 = vadd.f32 %v849, 1e-07
      %v866 = vadd.f32 %v850, 1e-07
      %v867 = vadd.f32 %v851, 1e-07
      %v868 = vadd.f32 %v852, 1e-07
      %v869 = vadd.f32 %v853, 1e-07
      %v870 = vadd.f32 %v854, 1e-07
      %v871 = vadd.f32 %v855, 1e-07
      %v872 = vadd.f32 %v856, 1e-07
      %v873 = vadd.f32 %v857, 1e-07
      %v874 = vadd.f32 %v858, 1e-07
      %v875 = vadd.f32 %v859, 1e-07
      %v876 = vadd.f32 %v860, 1e-07
      %v877 = vadd.f32 %v861, 1e-07
      %v878 = vadd.f32 %v862, 1e-07
      %v879 = vadd.f32 %v863, 1e-07
      %v880 = vlog2.pop %v864
      %v881 = vmul.f32 %v880, 0.6931472
      %v882 = vlog2.pop %v865
      %v883 = vmul.f32 %v882, 0.6931472
      %v884 = vlog2.pop %v866
      %v885 = vmul.f32 %v884, 0.6931472
      %v886 = vlog2.pop %v867
      %v887 = vmul.f32 %v886, 0.6931472
      %v888 = vlog2.pop %v868
      %v889 = vmul.f32 %v888, 0.6931472
      %v890 = vlog2.pop %v869
      %v891 = vmul.f32 %v890, 0.6931472
      %v892 = vlog2.pop %v870
      %v893 = vmul.f32 %v892, 0.6931472
      %v894 = vlog2.pop %v871
      %v895 = vmul.f32 %v894, 0.6931472
      %v896 = vlog2.pop %v872
      %v897 = vmul.f32 %v896, 0.6931472
      %v898 = vlog2.pop %v873
      %v899 = vmul.f32 %v898, 0.6931472
      %v900 = vlog2.pop %v874
      %v901 = vmul.f32 %v900, 0.6931472
      %v902 = vlog2.pop %v875
      %v903 = vmul.f32 %v902, 0.6931472
      %v904 = vlog2.pop %v876
      %v905 = vmul.f32 %v904, 0.6931472
      %v906 = vlog2.pop %v877
      %v907 = vmul.f32 %v906, 0.6931472
      %v908 = vlog2.pop %v878
      %v909 = vmul.f32 %v908, 0.6931472
      %v910 = vlog2.pop %v879
      %v911 = vmul.f32 %v910, 0.6931472
      %v912 = vsub.f32 %v832, %v881
      %v913 = vsub.f32 %v833, %v883
      %v914 = vsub.f32 %v834, %v885
      %v915 = vsub.f32 %v835, %v887
      %v916 = vsub.f32 %v836, %v889
      %v917 = vsub.f32 %v837, %v891
      %v918 = vsub.f32 %v838, %v893
      %v919 = vsub.f32 %v839, %v895
      %v920 = vsub.f32 %v840, %v897
      %v921 = vsub.f32 %v841, %v899
      %v922 = vsub.f32 %v842, %v901
      %v923 = vsub.f32 %v843, %v903
      %v924 = vsub.f32 %v844, %v905
      %v925 = vsub.f32 %v845, %v907
      %v926 = vsub.f32 %v846, %v909
      %v927 = vsub.f32 %v847, %v911
      %vm928 = vcmask 7168
      %929 = vst.msk [vmem:[%s2] sm:$0xff] %vm928, %v912
      %930 = vst.msk [vmem:[%s2 + $0x8] sm:$0xff] %vm928, %v913
      %931 = vst.msk [vmem:[%s2 + $0x10] sm:$0xff] %vm928, %v914
      %932 = vst.msk [vmem:[%s2 + $0x18] sm:$0xff] %vm928, %v915
      %933 = vst.msk [vmem:[%s2 + $0x20] sm:$0xff] %vm928, %v916
      %934 = vst.msk [vmem:[%s2 + $0x28] sm:$0xff] %vm928, %v917
      %935 = vst.msk [vmem:[%s2 + $0x30] sm:$0xff] %vm928, %v918
      %936 = vst.msk [vmem:[%s2 + $0x38] sm:$0xff] %vm928, %v919
      %937 = vst.msk [vmem:[%s2 + $0x40] sm:$0xff] %vm928, %v920
      %938 = vst.msk [vmem:[%s2 + $0x48] sm:$0xff] %vm928, %v921
      %939 = vst.msk [vmem:[%s2 + $0x50] sm:$0xff] %vm928, %v922
      %940 = vst.msk [vmem:[%s2 + $0x58] sm:$0xff] %vm928, %v923
      %941 = vst.msk [vmem:[%s2 + $0x60] sm:$0xff] %vm928, %v924
      %942 = vst.msk [vmem:[%s2 + $0x68] sm:$0xff] %vm928, %v925
      %943 = vst.msk [vmem:[%s2 + $0x70] sm:$0xff] %vm928, %v926
      %944 = vst.msk [vmem:[%s2 + $0x78] sm:$0xff] %vm928, %v927
    $region37: #{tpu_custom_call.1} parent=1 // pred_fallthru
      _
    // Predicated region
    $region38: #{tpu_custom_call.1} parent=1 // pred_check
      _
    $region39: #{tpu_custom_call.1} parent=1 // pred_check_branch
      %946 = sbr.rel (0) target = $region41
    $region40: #{tpu_custom_call.1} parent=1 // pred_region
      _
    $region41: #{tpu_custom_call.1} parent=1 // pred_fallthru
      _
    // Predicated region
    $region42: #{tpu_custom_call.1} parent=1 // pred_check
      _
    $region43: #{tpu_custom_call.1} parent=1 // pred_check_branch
      %948 = sbr.rel (0) target = $region45
    $region44: #{tpu_custom_call.1} parent=1 // pred_region
      _
    $region45: #{tpu_custom_call.1} parent=1 // pred_fallthru
      _
    %949 = vsyncpa [#allocation5], 1
    %950 = vsyncpa [#allocation7], 1

</llo_original>
